<compile_context>
chip_gen: v7x
topology: tpu7x:2x2x1
jax: 0.10.0
libtpu: 0.0.40
codegen_flags: <defaults>
</compile_context>

<pallas_src>
import functools
import math

import jax
import jax.numpy as jnp
from jax import lax
from jax.experimental import pallas as pl
from jax.experimental.pallas import tpu as pltpu

BN_EPS = 1e-5
EXPANSION = 4                      # torchvision-style Bottleneck expansion


def _vmem_limit(work_bytes):
    """Per-call scoped-VMEM request: double-buffered working set + headroom."""
    limit = max(2 * work_bytes + (4 << 20), 16 << 20)
    return int(min(max(limit, work_bytes + (2 << 20)), 40 << 20))


# ------------------ kernel 1: matmul + BN (+res) + ReLU ---------------------- #

def _mm_kernel(x_ref, w_ref, s_ref, b_ref, o_ref, *, relu):
    y = jnp.dot(x_ref[...], w_ref[...], preferred_element_type=jnp.float32)
    y = y * s_ref[...] + b_ref[...]
    if relu:
        y = jnp.maximum(y, 0.0)
    o_ref[...] = y.astype(o_ref.dtype)


def _mm_kernel_res(x_ref, w_ref, s_ref, b_ref, r_ref, o_ref, *, relu):
    y = jnp.dot(x_ref[...], w_ref[...], preferred_element_type=jnp.float32)
    y = y * s_ref[...] + b_ref[...] + r_ref[...].astype(jnp.float32)
    if relu:
        y = jnp.maximum(y, 0.0)
    o_ref[...] = y.astype(o_ref.dtype)


def fused_matmul_bn(x2d, w, scale, bias, residual=None, relu=True,
                    out_dtype=jnp.bfloat16, tm=512):
    """y = act((x2d @ w) * scale + bias [+ residual]); bf16 MXU, f32 accum.

    The full (K, N) weight (<= 4 MiB bf16 here) stays resident in VMEM via a
    constant-index block, so there is no K reduction grid axis, no accumulator
    scratch, and the weight is read from HBM exactly once per call.
    On v5e/v6e (128 MiB VMEM) tm can be raised to 1024 for larger batches;
    512 is kept as the default so the same tiling also fits v7x (64 MiB).
    """
    M, K = x2d.shape
    Kw, N = w.shape
    assert Kw == K

    x2d = x2d.astype(jnp.bfloat16)
    w = w.astype(jnp.bfloat16)
    s2 = scale.reshape(1, N).astype(jnp.float32)
    b2 = bias.reshape(1, N).astype(jnp.float32)

    if M < tm:
        tm = M
    if pl.cdiv(M, tm) == 1 and M >= 16:
        # keep >=2 blocks on the parallel axis so both v7x TensorCores get work
        tm = ((pl.cdiv(M, 2) + 7) // 8) * 8
    mt = pl.cdiv(M, tm)
    Mp = mt * tm
    if Mp != M:
        x2d = jnp.pad(x2d, ((0, Mp - M), (0, 0)))

    in_specs = [
        pl.BlockSpec((tm, K), lambda i: (i, 0)),
        pl.BlockSpec((K, N), lambda i: (0, 0)),     # resident weight (1 DMA)
        pl.BlockSpec((1, N), lambda i: (0, 0)),
        pl.BlockSpec((1, N), lambda i: (0, 0)),
    ]
    args = [x2d, w, s2, b2]
    if residual is not None:
        residual = residual.astype(jnp.bfloat16)
        if Mp != M:
            residual = jnp.pad(residual, ((0, Mp - M), (0, 0)))
        in_specs.append(pl.BlockSpec((tm, N), lambda i: (i, 0)))
        args.append(residual)
        kernel = functools.partial(_mm_kernel_res, relu=relu)
    else:
        kernel = functools.partial(_mm_kernel, relu=relu)

    out_isz = jnp.dtype(out_dtype).itemsize
    work_bytes = (2 * tm * K * 2) + K * N * 2 + 2 * N * 4 + (2 * tm * N * out_isz)
    if residual is not None:
        work_bytes += 2 * tm * N * 2

    out = pl.pallas_call(
        kernel,
        out_shape=jax.ShapeDtypeStruct((Mp, N), out_dtype),
        grid=(mt,),
        in_specs=in_specs,
        out_specs=pl.BlockSpec((tm, N), lambda i: (i, 0)),
        compiler_params=pltpu.CompilerParams(
            dimension_semantics=("parallel",),
            vmem_limit_bytes=_vmem_limit(work_bytes)),
        cost_estimate=pl.CostEstimate(
            flops=2 * Mp * N * K, transcendentals=0,
            bytes_accessed=(Mp * K * 2 + K * N * 2 + 2 * N * 4 + Mp * N * out_isz
                            + (Mp * N * 2 if residual is not None else 0))),
    )(*args)
    return out[:M] if Mp != M else out


# -------------- kernel 2: spatial kxk conv (stride) + BN + ReLU -------------- #

def _col_planes(slab, stride):
    """Split columns of (rows, Wp, Cin) by residue mod `stride` via reshape."""
    if stride == 1:
        return [slab]
    rows, wp, cin = slab.shape
    planes = slab.reshape(rows, wp // stride, stride, cin)
    return [planes[:, :, r, :] for r in range(stride)]


def _conv_kernel(x_ref, w_ref, s_ref, b_ref, o_ref, *,
                 ksize, stride, ho, wo, rc, relu):
    nb = x_ref.shape[0]
    wp = x_ref.shape[2]
    cin = x_ref.shape[3]
    cout = o_ref.shape[-1]
    scale = s_ref[...]
    bias = b_ref[...]
    nchunks = (ho + rc - 1) // rc

    for b in range(nb):
        for c in range(nchunks):
            r0 = c * rc
            rows = min(rc, ho - r0)
            acc = jnp.zeros((rows * wo, cout), jnp.float32)
            for dy in range(ksize):
                # contiguous row slab (all static slices; no strided Ref reads)
                slab = x_ref[pl.ds(b, 1),
                             pl.ds(r0 * stride + dy, rows * stride), :, :]
                slab = slab[0]
                if stride > 1:
                    # subsample rows via reshape/select on the loaded value
                    slab = slab.reshape(rows, stride, wp, cin)[:, 0]
                planes = _col_planes(slab, stride)
                wins = []
                for dx in range(ksize):
                    q, r = divmod(dx, stride)
                    wins.append(planes[r][:, q:q + wo, :])
                # fuse the ksize dx taps into one K = ksize*Cin contraction
                win = wins[0] if ksize == 1 else jnp.concatenate(wins, axis=-1)
                tap = w_ref[pl.ds(dy * ksize * cin, ksize * cin), :]
                acc = acc + jnp.dot(win.reshape(rows * wo, ksize * cin), tap,
                                    preferred_element_type=jnp.float32)
            y = acc * scale + bias
            if relu:
                y = jnp.maximum(y, 0.0)
            o_ref[pl.ds(b, 1), pl.ds(r0 * wo, rows * wo), :] = (
                y.astype(o_ref.dtype).reshape(1, rows * wo, cout))


def fused_conv_bn(x_nhwc, w, scale, bias, *, ksize, stride, relu=True,
                  out_dtype=jnp.bfloat16):
    """NHWC kxk conv (pad=(k-1)//2, stride) + folded BN + optional ReLU.

    The padded image(s) of one grid step are resident in VMEM (one HBM read of
    the input); the k*k taps are reduced in-kernel, dx-fused into per-dy
    K = k*Cin dots, with the f32 accumulator bounded by chunking output rows.
    TODO(synk): large (non-CIFAR) spatial maps would need H-tiling with a halo.
    """
    N, H, W, Cin = x_nhwc.shape
    KK, Cout = w.shape
    assert KK == ksize * ksize * Cin
    pad = (ksize - 1) // 2
    Ho = (H + 2 * pad - ksize) // stride + 1
    Wo = (W + 2 * pad - ksize) // stride + 1

    xp = x_nhwc.astype(jnp.bfloat16)
    if pad:
        xp = jnp.pad(xp, ((0, 0), (pad, pad), (pad, pad), (0, 0)))
    Hp, Wp = H + 2 * pad, W + 2 * pad
    assert stride == 1 or Wp % stride == 0

    # Batch several images per grid step when the spatial map is small (deep
    # stages) to amortize per-step overhead, but keep >=2 grid steps when
    # possible so both v7x TensorCores stay busy.
    nb_want = max(1, 512 // max(Ho * Wo, 1))
    nb = max(1, min(nb_want, N // 2)) if N >= 2 else 1
    Np = pl.cdiv(N, nb) * nb
    if Np != N:
        xp = jnp.pad(xp, ((0, Np - N), (0, 0), (0, 0), (0, 0)))

    w = w.astype(jnp.bfloat16)
    s2 = scale.reshape(1, Cout).astype(jnp.float32)
    b2 = bias.reshape(1, Cout).astype(jnp.float32)

    # chunk output rows so the per-chunk f32 accumulator stays <=64 KiB
    budget = (64 if ksize > 1 else 128) * 1024
    rc = max(1, min(Ho, budget // (Wo * Cout * 4)))

    kernel = functools.partial(_conv_kernel, ksize=ksize, stride=stride,
                               ho=Ho, wo=Wo, rc=rc, relu=relu)
    work_bytes = (2 * nb * Hp * Wp * Cin * 2) + KK * Cout * 2 \
                 + (2 * nb * Ho * Wo * Cout * 2) + 2 * Cout * 4

    out = pl.pallas_call(
        kernel,
        out_shape=jax.ShapeDtypeStruct((Np, Ho * Wo, Cout), out_dtype),
        grid=(Np // nb,),
        in_specs=[
            pl.BlockSpec((nb, Hp, Wp, Cin), lambda n: (n, 0, 0, 0)),
            pl.BlockSpec((KK, Cout), lambda n: (0, 0)),
            pl.BlockSpec((1, Cout), lambda n: (0, 0)),
            pl.BlockSpec((1, Cout), lambda n: (0, 0)),
        ],
        out_specs=pl.BlockSpec((nb, Ho * Wo, Cout), lambda n: (n, 0, 0)),
        compiler_params=pltpu.CompilerParams(
            dimension_semantics=("parallel",),
            vmem_limit_bytes=_vmem_limit(work_bytes)),
        cost_estimate=pl.CostEstimate(
            flops=2 * Np * Ho * Wo * KK * Cout, transcendentals=0,
            bytes_accessed=(Np * Hp * Wp * Cin * 2 + KK * Cout * 2
                            + 2 * Cout * 4 + Np * Ho * Wo * Cout * 2)),
    )(xp, w, s2, b2)
    out = out.reshape(Np, Ho, Wo, Cout)
    return out[:N] if Np != N else out


# ------------------------------ Bottleneck block ----------------------------- #

def bottleneck_forward(x, p, stride):
    """x: (N, H, W, Cin) bf16 NHWC -> (N, Ho, Wo, 4*planes) bf16."""
    N, H, W, Cin = x.shape
    planes = p["w2"].shape[1]
    cexp = p["w3"].shape[1]

    # conv1 (1x1) + bn1 + relu
    out = fused_matmul_bn(x.reshape(-1, Cin), p["w1"], p["s1"], p["b1"], relu=True)
    out = out.reshape(N, H, W, planes)

    # conv2 (3x3, stride, pad=1) + bn2 + relu  (in-kernel dx-fused tap reduction)
    out = fused_conv_bn(out, p["w2"], p["s2"], p["b2"], ksize=3, stride=stride,
                        relu=True)
    _, Ho, Wo, _ = out.shape

    # shortcut branch
    if "ws" in p:
        if stride == 1:
            sc = fused_matmul_bn(x.reshape(-1, Cin), p["ws"], p["ss"], p["bs"],
                                 relu=False)
        else:
            # strided 1x1 conv: subsample fused into the conv kernel
            sc = fused_conv_bn(x, p["ws"], p["ss"], p["bs"], ksize=1,
                               stride=stride, relu=False).reshape(-1, cexp)
    else:
        sc = x.reshape(-1, Cin)          # identity (Cin == cexp, stride == 1)

    # conv3 (1x1) + bn3 + residual add + relu, fused in one kernel
    out = fused_matmul_bn(out.reshape(-1, planes), p["w3"], p["s3"], p["b3"],
                          residual=sc, relu=True)
    return out.reshape(N, Ho, Wo, cexp)


# --------------------------------- ResNet ------------------------------------ #

def _im2col3x3(x_nhwc):
    """(N,H,W,C) -> (N*H*W, 9*C); taps in (dy, dx, c) order, pad=1, stride=1."""
    N, H, W, C = x_nhwc.shape
    xp = jnp.pad(x_nhwc, ((0, 0), (1, 1), (1, 1), (0, 0)))
    cols = [xp[:, dy:dy + H, dx:dx + W, :] for dy in range(3) for dx in range(3)]
    return jnp.concatenate(cols, axis=-1).reshape(N * H * W, 9 * C)


def resnet_forward(x_nchw, params, strides):
    x = jnp.transpose(x_nchw, (0, 2, 3, 1)).astype(jnp.bfloat16)     # NCHW -> NHWC
    N, H, W, Cin = x.shape

    # stem: 3x3 conv as one K=27 matmul (im2col of a 3-channel input is cheap
    # and avoids padding the 3-channel lane dim to 128 inside a conv kernel)
    out = fused_matmul_bn(_im2col3x3(x), params["stem_w"], params["stem_s"],
                          params["stem_b"], relu=True)
    out = out.reshape(N, H, W, -1)

    for p, stride in zip(params["blocks"], strides):
        out = bottleneck_forward(out, p, stride)

    # F.avg_pool2d(out, 4) + flatten + linear head.
    # TODO(synk): the 4x4 avg-pool / flatten / layout transposes are trivial XLA
    # glue (negligible bytes vs. the conv kernels).
    N, Hf, Wf, C = out.shape
    assert Hf == 4 and Wf == 4, "expects a 32x32 input (CIFAR-style ResNet)"
    pooled = out.astype(jnp.float32).reshape(N, Hf // 4, 4, Wf // 4, 4, C)
    feat = pooled.mean(axis=(2, 4)).reshape(N, -1)                    # (N, C)
    return fused_matmul_bn(feat, params["fc_w"], params["fc_s"], params["fc_b"],
                           relu=False, out_dtype=jnp.float32)


# ------------------------------ parameter setup ------------------------------ #

def _conv_w(key, cout, cin, k):
    fan_in = cin * k * k
    return jax.random.normal(key, (cout, cin, k, k), jnp.float32) * math.sqrt(2.0 / fan_in)


def _bn_fold(key, c):
    k1, k2, k3, k4 = jax.random.split(key, 4)
    gamma = jax.random.uniform(k1, (c,), minval=0.5, maxval=1.5)
    beta = jax.random.normal(k2, (c,)) * 0.1
    mean = jax.random.normal(k3, (c,)) * 0.1
    var = jax.random.uniform(k4, (c,), minval=0.5, maxval=1.5)
    scale = gamma / jnp.sqrt(var + BN_EPS)
    bias = beta - mean * scale
    return scale.astype(jnp.float32), bias.astype(jnp.float32)


def _to_mm(w_oihw):
    # OIHW -> (kh*kw*Cin, Cout), tap order (dy, dx, c) to match the kernels
    return jnp.transpose(w_oihw, (2, 3, 1, 0)).reshape(-1, w_oihw.shape[0])


def make_block_params(key, in_planes, planes, stride):
    ks = jax.random.split(key, 8)
    w1 = _conv_w(ks[0], planes, in_planes, 1)
    w2 = _conv_w(ks[1], planes, planes, 3)
    w3 = _conv_w(ks[2], EXPANSION * planes, planes, 1)
    s1, b1 = _bn_fold(ks[3], planes)
    s2, b2 = _bn_fold(ks[4], planes)
    s3, b3 = _bn_fold(ks[5], EXPANSION * planes)
    p = {"w1": _to_mm(w1), "w2": _to_mm(w2), "w3": _to_mm(w3),
         "s1": s1, "b1": b1, "s2": s2, "b2": b2, "s3": s3, "b3": b3,
         # HWIO copies for the pure-JAX reference
         "_w1": jnp.transpose(w1, (2, 3, 1, 0)),
         "_w2": jnp.transpose(w2, (2, 3, 1, 0)),
         "_w3": jnp.transpose(w3, (2, 3, 1, 0))}
    if stride != 1 or in_planes != EXPANSION * planes:
        ws = _conv_w(ks[6], EXPANSION * planes, in_planes, 1)
        ss, bs = _bn_fold(ks[7], EXPANSION * planes)
        p.update({"ws": _to_mm(ws), "ss": ss, "bs": bs,
                  "_ws": jnp.transpose(ws, (2, 3, 1, 0))})
    return p


def make_resnet_params(key, in_size, num_blocks, num_classes=10):
    planes_per_stage = (64, 128, 256, 512)
    stage_strides = (1, 2, 2, 2)
    keys = iter(jax.random.split(key, 3 + sum(num_blocks)))

    stem_w = _conv_w(next(keys), 64, in_size, 3)
    stem_s, stem_b = _bn_fold(next(keys), 64)
    params = {"stem_w": _to_mm(stem_w),
              "_stem_w": jnp.transpose(stem_w, (2, 3, 1, 0)),
              "stem_s": stem_s, "stem_b": stem_b, "blocks": []}
    strides = []
    in_planes = 64
    for planes, nb, s0 in zip(planes_per_stage, num_blocks, stage_strides):
        for i in range(nb):
            stride = s0 if i == 0 else 1
            params["blocks"].append(make_block_params(next(keys), in_planes, planes, stride))
            strides.append(stride)
            in_planes = planes * EXPANSION

    kw, kb = jax.random.split(next(keys))
    fc_w = jax.random.normal(kw, (num_classes, in_planes), jnp.float32) / math.sqrt(in_planes)
    params["fc_w"] = fc_w.T
    params["fc_b"] = jax.random.normal(kb, (num_classes,), jnp.float32) * 0.1
    params["fc_s"] = jnp.ones((num_classes,), jnp.float32)
    return params, tuple(strides)


# ------------------------------- JAX reference -------------------------------- #

def _conv_ref(x, w_hwio, stride, pad):
    return lax.conv_general_dilated(
        x, w_hwio.astype(jnp.bfloat16), (stride, stride),
        padding=[(pad, pad), (pad, pad)],
        dimension_numbers=("NHWC", "HWIO", "NHWC"),
        preferred_element_type=jnp.float32)


def _cbr_ref(x, w, s, b, stride, pad, relu=True):
    y = _conv_ref(x, w, stride, pad) * s + b
    if relu:
        y = jnp.maximum(y, 0.0)
    return y.astype(jnp.bfloat16)


def _block_ref(x, p, stride):
    o = _cbr_ref(x, p["_w1"], p["s1"], p["b1"], 1, 0)
    o = _cbr_ref(o, p["_w2"], p["s2"], p["b2"], stride, 1)
    o3 = _conv_ref(o, p["_w3"], 1, 0) * p["s3"] + p["b3"]
    if "ws" in p:
        sc = _cbr_ref(x, p["_ws"], p["ss"], p["bs"], stride, 0, relu=False)
    else:
        sc = x
    return jnp.maximum(o3 + sc.astype(jnp.float32), 0.0).astype(jnp.bfloat16)


def resnet_ref(x_nchw, params, strides):
    x = jnp.transpose(x_nchw, (0, 2, 3, 1)).astype(jnp.bfloat16)
    out = _cbr_ref(x, params["_stem_w"], params["stem_s"], params["stem_b"], 1, 1)
    for p, stride in zip(params["blocks"], strides):
        out = _block_ref(out, p, stride)
    N, Hf, Wf, C = out.shape
    pooled = out.astype(jnp.float32).reshape(N, Hf // 4, 4, Wf // 4, 4, C)
    feat = pooled.mean(axis=(2, 4)).reshape(N, -1)
    return jnp.dot(feat.astype(jnp.bfloat16), params["fc_w"].astype(jnp.bfloat16),
                   preferred_element_type=jnp.float32) + params["fc_b"]


# ------------------------------------ main ------------------------------------ #

if __name__ == "__main__":
    in_size, num_classes = 3, 10
    num_blocks = [1, 1, 1, 1]      # one Bottleneck per stage keeps the demo small
    N, H, W = 2, 32, 32            # 32x32 input so the final 4x4 avg-pool is valid

    key = jax.random.PRNGKey(0)
    kx, kp = jax.random.split(key)
    x = jax.random.normal(kx, (N, in_size, H, W), jnp.float32)   # NCHW like PyTorch
    params, strides = make_resnet_params(kp, in_size, num_blocks, num_classes)

    out = jax.block_until_ready(resnet_forward(x, params, strides))
    ref = jax.block_until_ready(resnet_ref(x, params, strides))

    assert out.shape == (N, num_classes), out.shape
    max_err = float(jnp.max(jnp.abs(out - ref)))
    ref_scale = float(jnp.max(jnp.abs(ref))) + 1e-6
    assert max_err <= 5e-2 * ref_scale + 5e-2, (max_err, ref_scale)

    print("KERNEL_OK")
</pallas_src>

<mosaic_0001>
module attributes {stable_mosaic.version = 11 : i64} {
  func.func @_mm_kernel(%arg0: i32, %arg1: memref<512x27xbf16, #tpu.memory_space<vmem>>, %arg2: memref<27x64xbf16, #tpu.memory_space<vmem>>, %arg3: memref<1x64xf32, #tpu.memory_space<vmem>>, %arg4: memref<1x64xf32, #tpu.memory_space<vmem>>, %arg5: memref<512x64xbf16, #tpu.memory_space<vmem>>) attributes {dimension_semantics = [#tpu.dimension_semantics<parallel>], iteration_bounds = array<i64: 4>, scalar_prefetch = 0 : i64, scratch_operands = 0 : i64, tpu.core_type = #tpu.core_type<tc>, window_params = [{transform_indices = @transform_0, window_bounds = array<i64: 512, 27>}, {pipeline_mode = #tpu.pipeline_mode<synchronous>, transform_indices = @transform_1, window_bounds = array<i64: 27, 64>}, {pipeline_mode = #tpu.pipeline_mode<synchronous>, transform_indices = @transform_2, window_bounds = array<i64: 1, 64>}, {pipeline_mode = #tpu.pipeline_mode<synchronous>, transform_indices = @transform_3, window_bounds = array<i64: 1, 64>}, {transform_indices = @transform_4, window_bounds = array<i64: 512, 64>}]} {
    %c0 = arith.constant 0 : index
    %c0_0 = arith.constant 0 : index
    %0 = vector.load %arg1[%c0, %c0_0] : memref<512x27xbf16, #tpu.memory_space<vmem>>, vector<512x27xbf16>
    %c0_1 = arith.constant 0 : index
    %c0_2 = arith.constant 0 : index
    %1 = vector.load %arg2[%c0_1, %c0_2] : memref<27x64xbf16, #tpu.memory_space<vmem>>, vector<27x64xbf16>
    %cst = arith.constant dense<0.000000e+00> : vector<512x64xf32>
    %2 = tpu.matmul %0, %1, %cst {dimension_numbers = #tpu.dot_dimension_numbers<[1], [0], [0], [1], [0, 0, 1, 1], [], []>} : vector<512x27xbf16>, vector<27x64xbf16>, vector<512x64xf32> -> vector<512x64xf32>
    %c0_3 = arith.constant 0 : index
    %c0_4 = arith.constant 0 : index
    %3 = vector.load %arg3[%c0_3, %c0_4] : memref<1x64xf32, #tpu.memory_space<vmem>>, vector<1x64xf32>
    %4 = vector.broadcast %3 : vector<1x64xf32> to vector<512x64xf32>
    %5 = arith.mulf %2, %4 : vector<512x64xf32>
    %c0_5 = arith.constant 0 : index
    %c0_6 = arith.constant 0 : index
    %6 = vector.load %arg4[%c0_5, %c0_6] : memref<1x64xf32, #tpu.memory_space<vmem>>, vector<1x64xf32>
    %7 = vector.broadcast %6 : vector<1x64xf32> to vector<512x64xf32>
    %8 = arith.addf %5, %7 : vector<512x64xf32>
    %cst_7 = arith.constant 0.000000e+00 : f32
    %9 = vector.broadcast %cst_7 : f32 to vector<512x64xf32>
    %10 = arith.maximumf %8, %9 : vector<512x64xf32>
    %11 = arith.truncf %10 : vector<512x64xf32> to vector<512x64xbf16>
    %c0_8 = arith.constant 0 : index
    %c0_9 = arith.constant 0 : index
    %12 = vector.load %arg5[%c0_8, %c0_9] : memref<512x64xbf16, #tpu.memory_space<vmem>>, vector<512x64xbf16>
    tpu.vector_store %arg5[%c0_8, %c0_9], %11 {strides = array<i32>} : memref<512x64xbf16, #tpu.memory_space<vmem>>, vector<512x64xbf16>,
    return
  }
  func.func @transform_0(%arg0: i32) -> (i32, i32) {
    %c0_i32 = arith.constant 0 : i32
    %c0_i32_0 = arith.constant 0 : i32
    return %arg0, %c0_i32 : i32, i32
  }
  func.func @transform_1(%arg0: i32) -> (i32, i32) {
    %c0_i32 = arith.constant 0 : i32
    %c0_i32_0 = arith.constant 0 : i32
    %c0_i32_1 = arith.constant 0 : i32
    return %c0_i32, %c0_i32_0 : i32, i32
  }
  func.func @transform_2(%arg0: i32) -> (i32, i32) {
    %c0_i32 = arith.constant 0 : i32
    %c0_i32_0 = arith.constant 0 : i32
    %c0_i32_1 = arith.constant 0 : i32
    return %c0_i32, %c0_i32_0 : i32, i32
  }
  func.func @transform_3(%arg0: i32) -> (i32, i32) {
    %c0_i32 = arith.constant 0 : i32
    %c0_i32_0 = arith.constant 0 : i32
    %c0_i32_1 = arith.constant 0 : i32
    return %c0_i32, %c0_i32_0 : i32, i32
  }
  func.func @transform_4(%arg0: i32) -> (i32, i32) {
    %c0_i32 = arith.constant 0 : i32
    %c0_i32_0 = arith.constant 0 : i32
    return %arg0, %c0_i32 : i32, i32
  }
}

</mosaic_0001>

<llo_original>
// kernel: tpu_custom_call.1
$region0: #{tpu_custom_call.1}
  #allocation0 [shape = 'u32[]', space=smem, size = 0x4, offset = 0x4, fixed_abs, tag = 'smem constant byte address 0x4 - core index']
  #allocation1 [shape = 'u32[144,128]{1,0:T(1,128)}', space=vmem, size = 0x12000, scoped, tag = 'internal scratch']
  %s0 = inlined_call_operand.vmem [shape: bf16[2048,27], index: 0, kind: input, shape index: {}]
  %s1 = inlined_call_operand.vmem [shape: bf16[27,64], index: 1, kind: input, shape index: {}]
  %s2 = inlined_call_operand.vmem [shape: f32[1,64], index: 2, kind: input, shape index: {}]
  %s3 = inlined_call_operand.vmem [shape: f32[1,64], index: 3, kind: input, shape index: {}]
  %s4 = inlined_call_operand.vmem [shape: bf16[2048,64], index: 4, kind: output, shape index: {}]
  %s5 = sld [smem:[#allocation0]]
  $region49: #{tpu_custom_call.1} parent=0
    _
  %s7 = ssub.s32 1, %s5
  %s8 = scalar_select 0, %s7, %s5
  loop: start=0, step=1, limit=6
  $region2: #{tpu_custom_call.1} parent=0 // loop_pre_header
    _
  $region3: #{tpu_custom_call.1} parent=0 // loop_header
    %s10 = sphi 0, %s14
    %p11 = scmp.ge.s32.totalorder %s10, 6
    %s20 = sphi 0, %s22
    %s23 = sphi 0, %s20
    %s24 = sphi 0, %s23
    %s40 = sphi 0, %s24
    %s44 = sphi 0, %s44
    %s46 = sphi 0, %s44
    %s47 = sphi 0, %s46
    %s61 = sphi 0, %s47
    %s65 = sphi 0, %s65
    %s67 = sphi 0, %s65
    %s68 = sphi 0, %s67
    %s82 = sphi 0, %s68
    %s86 = sphi 0, %s86
    %s88 = sphi 0, %s86
    %s89 = sphi 0, %s88
    %s103 = sphi 0, %s89
    %s109 = sphi 0, %s111
    %s112 = sphi 0, %s109
    %s113 = sphi 0, %s112
    %s129 = sphi 0, %s113
  $region4: #{tpu_custom_call.1} parent=0 // loop_header_branch
    %13 = sbr.rel (%p11) target = $region8
  $region5: #{tpu_custom_call.1} parent=0 // loop_body
    %s15 = ssub.s32 %s10, 1
    %s16 = ssub.s32 %s10, 2
    %s17 = sadd.s32 %s10, 1
    %s18 = ssub.s32 %s10, %s17
    %p19 = scmp.eq.s32.totalorder %s18, 0
    %s21 = sadd.s32 %s20, 1
    %s22 = scalar_select %p19, %s20, %s21
    %p25 = pneg %p19
    %p26 = scmp.eq.s32.totalorder %s10, 3
    %p27 = por %p25, %p26
    %p28 = scmp.ne.s32.totalorder %s20, %s23
    %p29 = scmp.eq.s32.totalorder %s10, 0
    %p30 = por %p28, %p29
    %p31 = scmp.ne.s32.totalorder %s20, %s23
    %p32 = scmp.eq.s32.totalorder %s15, 3
    %p33 = por %p31, %p32
    %p34 = scmp.ne.s32.totalorder %s23, %s24
    %p35 = scmp.eq.s32.totalorder %s15, 0
    %p36 = por %p34, %p35
    %p37 = scmp.ne.s32.totalorder %s23, %s24
    %p38 = scmp.eq.s32.totalorder %s16, 3
    %p39 = por %p37, %p38
    %p41 = scmp.ne.s32.totalorder %s24, %s40
    %p42 = scmp.eq.s32.totalorder %s16, 0
    %p43 = por %p41, %p42
    %s45 = sadd.s32 %s44, 1
    %p48 = scmp.eq.s32.totalorder %s10, 3
    %p49 = scmp.ne.s32.totalorder %s44, %s46
    %p50 = scmp.eq.s32.totalorder %s10, 0
    %p51 = por %p49, %p50
    %p52 = scmp.ne.s32.totalorder %s44, %s46
    %p53 = scmp.eq.s32.totalorder %s15, 3
    %p54 = por %p52, %p53
    %p55 = scmp.ne.s32.totalorder %s46, %s47
    %p56 = scmp.eq.s32.totalorder %s15, 0
    %p57 = por %p55, %p56
    %p58 = scmp.ne.s32.totalorder %s46, %s47
    %p59 = scmp.eq.s32.totalorder %s16, 3
    %p60 = por %p58, %p59
    %p62 = scmp.ne.s32.totalorder %s47, %s61
    %p63 = scmp.eq.s32.totalorder %s16, 0
    %p64 = por %p62, %p63
    %s66 = sadd.s32 %s65, 1
    %p69 = scmp.eq.s32.totalorder %s10, 3
    %p70 = scmp.ne.s32.totalorder %s65, %s67
    %p71 = scmp.eq.s32.totalorder %s10, 0
    %p72 = por %p70, %p71
    %p73 = scmp.ne.s32.totalorder %s65, %s67
    %p74 = scmp.eq.s32.totalorder %s15, 3
    %p75 = por %p73, %p74
    %p76 = scmp.ne.s32.totalorder %s67, %s68
    %p77 = scmp.eq.s32.totalorder %s15, 0
    %p78 = por %p76, %p77
    %p79 = scmp.ne.s32.totalorder %s67, %s68
    %p80 = scmp.eq.s32.totalorder %s16, 3
    %p81 = por %p79, %p80
    %p83 = scmp.ne.s32.totalorder %s68, %s82
    %p84 = scmp.eq.s32.totalorder %s16, 0
    %p85 = por %p83, %p84
    %s87 = sadd.s32 %s86, 1
    %p90 = scmp.eq.s32.totalorder %s10, 3
    %p91 = scmp.ne.s32.totalorder %s86, %s88
    %p92 = scmp.eq.s32.totalorder %s10, 0
    %p93 = por %p91, %p92
    %p94 = scmp.ne.s32.totalorder %s86, %s88
    %p95 = scmp.eq.s32.totalorder %s15, 3
    %p96 = por %p94, %p95
    %p97 = scmp.ne.s32.totalorder %s88, %s89
    %p98 = scmp.eq.s32.totalorder %s15, 0
    %p99 = por %p97, %p98
    %p100 = scmp.ne.s32.totalorder %s88, %s89
    %p101 = scmp.eq.s32.totalorder %s16, 3
    %p102 = por %p100, %p101
    %p104 = scmp.ne.s32.totalorder %s89, %s103
    %p105 = scmp.eq.s32.totalorder %s16, 0
    %p106 = por %p104, %p105
    %s107 = ssub.s32 %s10, %s17
    %p108 = scmp.eq.s32.totalorder %s107, 0
    %s110 = sadd.s32 %s109, 1
    %s111 = scalar_select %p108, %s109, %s110
    %p114 = pneg %p108
    %p115 = scmp.eq.s32.totalorder %s10, 3
    %p116 = por %p114, %p115
    %p117 = scmp.ne.s32.totalorder %s109, %s112
    %p118 = scmp.eq.s32.totalorder %s10, 0
    %p119 = por %p117, %p118
    %p120 = scmp.ne.s32.totalorder %s109, %s112
    %p121 = scmp.eq.s32.totalorder %s15, 3
    %p122 = por %p120, %p121
    %p123 = scmp.ne.s32.totalorder %s112, %s113
    %p124 = scmp.eq.s32.totalorder %s15, 0
    %p125 = por %p123, %p124
    %p126 = scmp.ne.s32.totalorder %s112, %s113
    %p127 = scmp.eq.s32.totalorder %s16, 3
    %p128 = por %p126, %p127
    %p130 = scmp.ne.s32.totalorder %s113, %s129
    %p131 = scmp.eq.s32.totalorder %s16, 0
    %p132 = por %p130, %p131
    %p133 = scmp.le.s32.totalorder 1, %s10
    %p134 = scmp.lt.s32.totalorder %s10, 5
    %p135 = pnand %p133, %p134
    %p136 = pneg %p135
    // Predicated region
    $region9: #{tpu_custom_call.1} parent=5 // pred_check
      _
    $region10: #{tpu_custom_call.1} parent=5 // pred_check_branch
      %138 = sbr.rel (%p135) target = $region12
    $region11: #{tpu_custom_call.1} parent=5 // pred_region
      %s139 = ssub.s32 %s10, 1
      // Predicated region
      $region13: #{tpu_custom_call.1} parent=11 // pred_check
        %p140 = pneg %p57
      $region14: #{tpu_custom_call.1} parent=11 // pred_check_branch
        %142 = sbr.rel (%p140) target = $region16
      $region15: #{tpu_custom_call.1} parent=11 // pred_region
        _
      $region16: #{tpu_custom_call.1} parent=11 // pred_fallthru
        _
      // Predicated region
      $region17: #{tpu_custom_call.1} parent=11 // pred_check
        %p143 = pneg %p78
      $region18: #{tpu_custom_call.1} parent=11 // pred_check_branch
        %145 = sbr.rel (%p143) target = $region20
      $region19: #{tpu_custom_call.1} parent=11 // pred_region
        _
      $region20: #{tpu_custom_call.1} parent=11 // pred_fallthru
        _
      // Predicated region
      $region21: #{tpu_custom_call.1} parent=11 // pred_check
        %p146 = pneg %p99
      $region22: #{tpu_custom_call.1} parent=11 // pred_check_branch
        %148 = sbr.rel (%p146) target = $region24
      $region23: #{tpu_custom_call.1} parent=11 // pred_region
        _
      $region24: #{tpu_custom_call.1} parent=11 // pred_fallthru
        _
    $region12: #{tpu_custom_call.1} parent=5 // pred_fallthru
      _
    %p149 = scmp.lt.s32.totalorder %s10, 4
    // Predicated region
    $region25: #{tpu_custom_call.1} parent=5 // pred_check
      %p150 = pneg %p149
    $region26: #{tpu_custom_call.1} parent=5 // pred_check_branch
      %152 = sbr.rel (%p150) target = $region28
    $region27: #{tpu_custom_call.1} parent=5 // pred_region
      // Predicated region
      $region29: #{tpu_custom_call.1} parent=27 // pred_check
        %p153 = pneg %p30
      $region30: #{tpu_custom_call.1} parent=27 // pred_check_branch
        %155 = sbr.rel (%p153) target = $region32
      $region31: #{tpu_custom_call.1} parent=27 // pred_region
        %s156 = smul.u32 64, %s10
        %p157 = scmp.lt.s32.totalorder %s156, 255
        %s158 = scalar_select %p157, %s156, 255
        %s159 = smul.addr %s158, 4
        %s160 = scalar_lea.vmem %s0, %s159
        %s161 = smul.u32 64, %s10
      $region32: #{tpu_custom_call.1} parent=27 // pred_fallthru
        _
    $region28: #{tpu_custom_call.1} parent=5 // pred_fallthru
      _
    %p162 = scmp.le.s32.totalorder 1, %s10
    %p163 = scmp.lt.s32.totalorder %s10, 5
    %p164 = pnand %p162, %p163
    %p165 = pneg %p164
    // Predicated region
    $region33: #{tpu_custom_call.1} parent=5 // pred_check
      _
    $region34: #{tpu_custom_call.1} parent=5 // pred_check_branch
      %167 = sbr.rel (%p164) target = $region36
    $region35: #{tpu_custom_call.1} parent=5 // pred_region
      %s168 = ssub.s32 %s10, 1
      %s169 = smul.u32 64, %s15
      %p170 = scmp.lt.s32.totalorder %s169, 255
      %s171 = scalar_select %p170, %s169, 255
      %s172 = smul.addr %s171, 4
      %s173 = scalar_lea.vmem %s0, %s172
      %p174 = pneg %p36
      %p175 = pneg %p33
      %p176 = pneg %p57
      %p177 = pneg %p54
      %p178 = pneg %p78
      %p179 = pneg %p75
      %p180 = pneg %p99
      %p181 = pneg %p96
      %p182 = pneg %p125
      %p183 = pneg %p122
      %s184 = smul.u32 64, %s15
      %p185 = scmp.lt.s32.totalorder %s184, 255
      %s186 = scalar_select %p185, %s184, 255
      %s187 = smul.addr %s186, 4
      %s188 = scalar_lea.vmem %s4, %s187
      %s189 = smul.u32 64, %s15
      %p190 = scmp.lt.s32.totalorder %s189, 255
      %s191 = scalar_select %p190, %s189, 255
      %s192 = smul.addr %s191, 4
      %s193 = scalar_lea.vmem %s0, %s192
      %s194 = smul.u32 64, %s15
      %s195 = smul.u32 64, %s15
      %p196 = scmp.lt.s32.totalorder %s195, 255
      %s197 = scalar_select %p196, %s195, 255
      %s198 = smul.addr %s197, 4
      %s199 = scalar_lea.vmem %s4, %s198
      %s200 = smul.u32 64, %s15
      %v202 = vld [vmem:[%s193] sm:$0xf]
      %v203 = vld [vmem:[%s193 + $0x4] sm:$0xf]
      %v204 = vld [vmem:[%s193 + $0x8] sm:$0xf]
      %v205 = vld [vmem:[%s193 + $0xc] sm:$0xf]
      %v206 = vld [vmem:[%s193 + $0x10] sm:$0xf]
      %v207 = vld [vmem:[%s193 + $0x14] sm:$0xf]
      %v208 = vld [vmem:[%s193 + $0x18] sm:$0xf]
      %v209 = vld [vmem:[%s193 + $0x1c] sm:$0xf]
      %v210 = vld [vmem:[%s193 + $0x20] sm:$0xf]
      %v211 = vld [vmem:[%s193 + $0x24] sm:$0xf]
      %v212 = vld [vmem:[%s193 + $0x28] sm:$0xf]
      %v213 = vld [vmem:[%s193 + $0x2c] sm:$0xf]
      %v214 = vld [vmem:[%s193 + $0x30] sm:$0xf]
      %v215 = vld [vmem:[%s193 + $0x34] sm:$0xf]
      %v216 = vld [vmem:[%s193 + $0x38] sm:$0xf]
      %v217 = vld [vmem:[%s193 + $0x3c] sm:$0xf]
      %v218 = vld [vmem:[%s193 + $0x40] sm:$0xf]
      %v219 = vld [vmem:[%s193 + $0x44] sm:$0xf]
      %v220 = vld [vmem:[%s193 + $0x48] sm:$0xf]
      %v221 = vld [vmem:[%s193 + $0x4c] sm:$0xf]
      %v222 = vld [vmem:[%s193 + $0x50] sm:$0xf]
      %v223 = vld [vmem:[%s193 + $0x54] sm:$0xf]
      %v224 = vld [vmem:[%s193 + $0x58] sm:$0xf]
      %v225 = vld [vmem:[%s193 + $0x5c] sm:$0xf]
      %v226 = vld [vmem:[%s193 + $0x60] sm:$0xf]
      %v227 = vld [vmem:[%s193 + $0x64] sm:$0xf]
      %v228 = vld [vmem:[%s193 + $0x68] sm:$0xf]
      %v229 = vld [vmem:[%s193 + $0x6c] sm:$0xf]
      %v230 = vld [vmem:[%s193 + $0x70] sm:$0xf]
      %v231 = vld [vmem:[%s193 + $0x74] sm:$0xf]
      %v232 = vld [vmem:[%s193 + $0x78] sm:$0xf]
      %v233 = vld [vmem:[%s193 + $0x7c] sm:$0xf]
      %v234 = vld [vmem:[%s193 + $0x80] sm:$0xf]
      %v235 = vld [vmem:[%s193 + $0x84] sm:$0xf]
      %v236 = vld [vmem:[%s193 + $0x88] sm:$0xf]
      %v237 = vld [vmem:[%s193 + $0x8c] sm:$0xf]
      %v238 = vld [vmem:[%s193 + $0x90] sm:$0xf]
      %v239 = vld [vmem:[%s193 + $0x94] sm:$0xf]
      %v240 = vld [vmem:[%s193 + $0x98] sm:$0xf]
      %v241 = vld [vmem:[%s193 + $0x9c] sm:$0xf]
      %v242 = vld [vmem:[%s193 + $0xa0] sm:$0xf]
      %v243 = vld [vmem:[%s193 + $0xa4] sm:$0xf]
      %v244 = vld [vmem:[%s193 + $0xa8] sm:$0xf]
      %v245 = vld [vmem:[%s193 + $0xac] sm:$0xf]
      %v246 = vld [vmem:[%s193 + $0xb0] sm:$0xf]
      %v247 = vld [vmem:[%s193 + $0xb4] sm:$0xf]
      %v248 = vld [vmem:[%s193 + $0xb8] sm:$0xf]
      %v249 = vld [vmem:[%s193 + $0xbc] sm:$0xf]
      %v250 = vld [vmem:[%s193 + $0xc0] sm:$0xf]
      %v251 = vld [vmem:[%s193 + $0xc4] sm:$0xf]
      %v252 = vld [vmem:[%s193 + $0xc8] sm:$0xf]
      %v253 = vld [vmem:[%s193 + $0xcc] sm:$0xf]
      %v254 = vld [vmem:[%s193 + $0xd0] sm:$0xf]
      %v255 = vld [vmem:[%s193 + $0xd4] sm:$0xf]
      %v256 = vld [vmem:[%s193 + $0xd8] sm:$0xf]
      %v257 = vld [vmem:[%s193 + $0xdc] sm:$0xf]
      %v258 = vld [vmem:[%s193 + $0xe0] sm:$0xf]
      %v259 = vld [vmem:[%s193 + $0xe4] sm:$0xf]
      %v260 = vld [vmem:[%s193 + $0xe8] sm:$0xf]
      %v261 = vld [vmem:[%s193 + $0xec] sm:$0xf]
      %v262 = vld [vmem:[%s193 + $0xf0] sm:$0xf]
      %v263 = vld [vmem:[%s193 + $0xf4] sm:$0xf]
      %v264 = vld [vmem:[%s193 + $0xf8] sm:$0xf]
      %v265 = vld [vmem:[%s193 + $0xfc] sm:$0xf]
      %v266 = vld [vmem:[%s1] sm:$0xf]
      %v267 = vld [vmem:[%s1 + $0x4] sm:$0xf]
      %v268 = vld [vmem:[%s1 + $0x8] sm:$0xf]
      %v269 = vld [vmem:[%s1 + $0xc] sm:$0x3]
      %v334 = vunpack.c.l.b16 %v202
      %v335 = vunpack.c.l.b16 %v203
      %v336 = vunpack.c.l.b16 %v204
      %v337 = vunpack.c.l.b16 %v205
      %v338 = vunpack.c.l.b16 %v206
      %v339 = vunpack.c.l.b16 %v207
      %v340 = vunpack.c.l.b16 %v208
      %v341 = vunpack.c.l.b16 %v209
      %v342 = vunpack.c.l.b16 %v210
      %v343 = vunpack.c.l.b16 %v211
      %v344 = vunpack.c.l.b16 %v212
      %v345 = vunpack.c.l.b16 %v213
      %v346 = vunpack.c.l.b16 %v214
      %v347 = vunpack.c.l.b16 %v215
      %v348 = vunpack.c.l.b16 %v216
      %v349 = vunpack.c.l.b16 %v217
      %v350 = vunpack.c.l.b16 %v218
      %v351 = vunpack.c.l.b16 %v219
      %v352 = vunpack.c.l.b16 %v220
      %v353 = vunpack.c.l.b16 %v221
      %v354 = vunpack.c.l.b16 %v222
      %v355 = vunpack.c.l.b16 %v223
      %v356 = vunpack.c.l.b16 %v224
      %v357 = vunpack.c.l.b16 %v225
      %v358 = vunpack.c.l.b16 %v226
      %v359 = vunpack.c.l.b16 %v227
      %v360 = vunpack.c.l.b16 %v228
      %v361 = vunpack.c.l.b16 %v229
      %v362 = vunpack.c.l.b16 %v230
      %v363 = vunpack.c.l.b16 %v231
      %v364 = vunpack.c.l.b16 %v232
      %v365 = vunpack.c.l.b16 %v233
      %v366 = vunpack.c.l.b16 %v234
      %v367 = vunpack.c.l.b16 %v235
      %v368 = vunpack.c.l.b16 %v236
      %v369 = vunpack.c.l.b16 %v237
      %v370 = vunpack.c.l.b16 %v238
      %v371 = vunpack.c.l.b16 %v239
      %v372 = vunpack.c.l.b16 %v240
      %v373 = vunpack.c.l.b16 %v241
      %v374 = vunpack.c.l.b16 %v242
      %v375 = vunpack.c.l.b16 %v243
      %v376 = vunpack.c.l.b16 %v244
      %v377 = vunpack.c.l.b16 %v245
      %v378 = vunpack.c.l.b16 %v246
      %v379 = vunpack.c.l.b16 %v247
      %v380 = vunpack.c.l.b16 %v248
      %v381 = vunpack.c.l.b16 %v249
      %v382 = vunpack.c.l.b16 %v250
      %v383 = vunpack.c.l.b16 %v251
      %v384 = vunpack.c.l.b16 %v252
      %v385 = vunpack.c.l.b16 %v253
      %v386 = vunpack.c.l.b16 %v254
      %v387 = vunpack.c.l.b16 %v255
      %v388 = vunpack.c.l.b16 %v256
      %v389 = vunpack.c.l.b16 %v257
      %v390 = vunpack.c.l.b16 %v258
      %v391 = vunpack.c.l.b16 %v259
      %v392 = vunpack.c.l.b16 %v260
      %v393 = vunpack.c.l.b16 %v261
      %v394 = vunpack.c.l.b16 %v262
      %v395 = vunpack.c.l.b16 %v263
      %v396 = vunpack.c.l.b16 %v264
      %v397 = vunpack.c.l.b16 %v265
      %v398 = vpack.c.b16 %v335, %v334
      %v399 = vpack.c.b16 %v337, %v336
      %v400 = vpack.c.b16 %v339, %v338
      %v401 = vpack.c.b16 %v341, %v340
      %v402 = vpack.c.b16 %v343, %v342
      %v403 = vpack.c.b16 %v345, %v344
      %v404 = vpack.c.b16 %v347, %v346
      %v405 = vpack.c.b16 %v349, %v348
      %v406 = vpack.c.b16 %v351, %v350
      %v407 = vpack.c.b16 %v353, %v352
      %v408 = vpack.c.b16 %v355, %v354
      %v409 = vpack.c.b16 %v357, %v356
      %v410 = vpack.c.b16 %v359, %v358
      %v411 = vpack.c.b16 %v361, %v360
      %v412 = vpack.c.b16 %v363, %v362
      %v413 = vpack.c.b16 %v365, %v364
      %v414 = vpack.c.b16 %v367, %v366
      %v415 = vpack.c.b16 %v369, %v368
      %v416 = vpack.c.b16 %v371, %v370
      %v417 = vpack.c.b16 %v373, %v372
      %v418 = vpack.c.b16 %v375, %v374
      %v419 = vpack.c.b16 %v377, %v376
      %v420 = vpack.c.b16 %v379, %v378
      %v421 = vpack.c.b16 %v381, %v380
      %v422 = vpack.c.b16 %v383, %v382
      %v423 = vpack.c.b16 %v385, %v384
      %v424 = vpack.c.b16 %v387, %v386
      %v425 = vpack.c.b16 %v389, %v388
      %v426 = vpack.c.b16 %v391, %v390
      %v427 = vpack.c.b16 %v393, %v392
      %v428 = vpack.c.b16 %v395, %v394
      %v429 = vpack.c.b16 %v397, %v396
      %v434 = vunpack.c.l.b16 %v266
      %v435 = vunpack.c.l.b16 %v267
      %v436 = vunpack.c.l.b16 %v268
      %v437 = vunpack.c.l.b16 %v269
      %v438 = vpack.c.b16 %v435, %v434
      %v439 = vpack.c.b16 %v437, %v436
      %vm441 = vcmask 220160
      %v443 = vsel %vm441, %v398, 0
      %v446 = vsel %vm441, %v399, 0
      %v449 = vsel %vm441, %v400, 0
      %v452 = vsel %vm441, %v401, 0
      %v455 = vsel %vm441, %v402, 0
      %v458 = vsel %vm441, %v403, 0
      %v461 = vsel %vm441, %v404, 0
      %v464 = vsel %vm441, %v405, 0
      %v467 = vsel %vm441, %v406, 0
      %v470 = vsel %vm441, %v407, 0
      %v473 = vsel %vm441, %v408, 0
      %v476 = vsel %vm441, %v409, 0
      %v479 = vsel %vm441, %v410, 0
      %v482 = vsel %vm441, %v411, 0
      %v485 = vsel %vm441, %v412, 0
      %v488 = vsel %vm441, %v413, 0
      %v491 = vsel %vm441, %v414, 0
      %v494 = vsel %vm441, %v415, 0
      %v497 = vsel %vm441, %v416, 0
      %v500 = vsel %vm441, %v417, 0
      %v503 = vsel %vm441, %v418, 0
      %v506 = vsel %vm441, %v419, 0
      %v509 = vsel %vm441, %v420, 0
      %v512 = vsel %vm441, %v421, 0
      %v515 = vsel %vm441, %v422, 0
      %v518 = vsel %vm441, %v423, 0
      %v521 = vsel %vm441, %v424, 0
      %v524 = vsel %vm441, %v425, 0
      %v527 = vsel %vm441, %v426, 0
      %v530 = vsel %vm441, %v427, 0
      %v533 = vsel %vm441, %v428, 0
      %v536 = vsel %vm441, %v429, 0
      %vm538 = vcmask 1044480
      %vm539 = vcmask 1045504
      %v540 = vsel %vm538, 4294967295, 65535
      %v541 = vsel %vm539, %v540, 0
      %v543 = vand.u32 %v439, %v541
      %545 = vmatprep.subr.bf16.mxu0 0
      %546 = vmatpush1.bf16.msra.mxu0 %v438
      %547 = vmatprep.subr.bf16.mxu0 0
      %548 = vmatpush1.bf16.msra.mxu0 %v543
      %549 = vmatprep.subr.bf16.mxu0 0
      %550 = vmatpush1.bf16.msra.mxu0 0
      %551 = vmatprep.subr.bf16.mxu0 0
      %552 = vmatpush1.bf16.msra.mxu0 0
      %553 = vmatprep.subr.bf16.mxu0 0
      %554 = vmatpush1.bf16.msra.mxu0 0
      %555 = vmatprep.subr.bf16.mxu0 0
      %556 = vmatpush1.bf16.msra.mxu0 0
      %557 = vmatprep.subr.bf16.mxu0 0
      %558 = vmatpush1.bf16.msra.mxu0 0
      %559 = vmatprep.subr.bf16.mxu0 0
      %560 = vmatpush1.bf16.msra.mxu0 0
      %561 = vmatprep.subr.bf16.mxu0 0
      %562 = vmatpush1.bf16.msra.mxu0 0
      %563 = vmatprep.subr.bf16.mxu0 0
      %564 = vmatpush1.bf16.msra.mxu0 0
      %565 = vmatprep.subr.bf16.mxu0 0
      %566 = vmatpush1.bf16.msra.mxu0 0
      %567 = vmatprep.subr.bf16.mxu0 0
      %568 = vmatpush1.bf16.msra.mxu0 0
      %569 = vmatprep.subr.bf16.mxu0 0
      %570 = vmatpush1.bf16.msra.mxu0 0
      %571 = vmatprep.subr.bf16.mxu0 0
      %572 = vmatpush1.bf16.msra.mxu0 0
      %573 = vmatprep.subr.bf16.mxu0 0
      %574 = vmatpush1.bf16.msra.mxu0 0
      %575 = vmatprep.subr.bf16.mxu0 0
      %576 = vmatpush1.bf16.msra.mxu0 0
      %577 = vmatprep.mubr.bf16.mxu0 0
      %578 = vmatmul.mubr.bf16.gmra.mrb[0].mxu0 %v443
      %v579 = vpop.f32.mrb[0].mxu0
      %v580 = vadd.f32 0.0, %v579
      %v581 = vpop.f32.mrb[0].mxu0
      %v582 = vpop.f32.mrb[0].mxu0
      %v583 = vadd.f32 0.0, %v582
      %v584 = vpop.f32.mrb[0].mxu0
      %585 = vmatprep.mubr.bf16.mxu0 0
      %586 = vmatmul.mubr.bf16.gmra.mrb[0].mxu0 %v446
      %v587 = vpop.f32.mrb[0].mxu0
      %v588 = vadd.f32 0.0, %v587
      %v589 = vpop.f32.mrb[0].mxu0
      %v590 = vpop.f32.mrb[0].mxu0
      %v591 = vadd.f32 0.0, %v590
      %v592 = vpop.f32.mrb[0].mxu0
      %593 = vmatprep.mubr.bf16.mxu0 0
      %594 = vmatmul.mubr.bf16.gmra.mrb[0].mxu0 %v449
      %v595 = vpop.f32.mrb[0].mxu0
      %v596 = vadd.f32 0.0, %v595
      %v597 = vpop.f32.mrb[0].mxu0
      %v598 = vpop.f32.mrb[0].mxu0
      %v599 = vadd.f32 0.0, %v598
      %v600 = vpop.f32.mrb[0].mxu0
      %601 = vmatprep.mubr.bf16.mxu0 0
      %602 = vmatmul.mubr.bf16.gmra.mrb[0].mxu0 %v452
      %v603 = vpop.f32.mrb[0].mxu0
      %v604 = vadd.f32 0.0, %v603
      %v605 = vpop.f32.mrb[0].mxu0
      %v606 = vpop.f32.mrb[0].mxu0
      %v607 = vadd.f32 0.0, %v606
      %v608 = vpop.f32.mrb[0].mxu0
      %609 = vmatprep.mubr.bf16.mxu0 0
      %610 = vmatmul.mubr.bf16.gmra.mrb[0].mxu0 %v455
      %v611 = vpop.f32.mrb[0].mxu0
      %v612 = vadd.f32 0.0, %v611
      %v613 = vpop.f32.mrb[0].mxu0
      %v614 = vpop.f32.mrb[0].mxu0
      %v615 = vadd.f32 0.0, %v614
      %v616 = vpop.f32.mrb[0].mxu0
      %617 = vmatprep.mubr.bf16.mxu0 0
      %618 = vmatmul.mubr.bf16.gmra.mrb[0].mxu0 %v458
      %v619 = vpop.f32.mrb[0].mxu0
      %v620 = vadd.f32 0.0, %v619
      %v621 = vpop.f32.mrb[0].mxu0
      %v622 = vpop.f32.mrb[0].mxu0
      %v623 = vadd.f32 0.0, %v622
      %v624 = vpop.f32.mrb[0].mxu0
      %625 = vmatprep.mubr.bf16.mxu0 0
      %626 = vmatmul.mubr.bf16.gmra.mrb[0].mxu0 %v461
      %v627 = vpop.f32.mrb[0].mxu0
      %v628 = vadd.f32 0.0, %v627
      %v629 = vpop.f32.mrb[0].mxu0
      %v630 = vpop.f32.mrb[0].mxu0
      %v631 = vadd.f32 0.0, %v630
      %v632 = vpop.f32.mrb[0].mxu0
      %633 = vmatprep.mubr.bf16.mxu0 0
      %634 = vmatmul.mubr.bf16.gmra.mrb[0].mxu0 %v464
      %v635 = vpop.f32.mrb[0].mxu0
      %v636 = vadd.f32 0.0, %v635
      %v637 = vpop.f32.mrb[0].mxu0
      %v638 = vpop.f32.mrb[0].mxu0
      %v639 = vadd.f32 0.0, %v638
      %v640 = vpop.f32.mrb[0].mxu0
      %641 = vmatprep.mubr.bf16.mxu0 0
      %642 = vmatmul.mubr.bf16.gmra.mrb[0].mxu0 %v467
      %v643 = vpop.f32.mrb[0].mxu0
      %v644 = vadd.f32 0.0, %v643
      %v645 = vpop.f32.mrb[0].mxu0
      %v646 = vpop.f32.mrb[0].mxu0
      %v647 = vadd.f32 0.0, %v646
      %v648 = vpop.f32.mrb[0].mxu0
      %649 = vmatprep.mubr.bf16.mxu0 0
      %650 = vmatmul.mubr.bf16.gmra.mrb[0].mxu0 %v470
      %v651 = vpop.f32.mrb[0].mxu0
      %v652 = vadd.f32 0.0, %v651
      %v653 = vpop.f32.mrb[0].mxu0
      %v654 = vpop.f32.mrb[0].mxu0
      %v655 = vadd.f32 0.0, %v654
      %v656 = vpop.f32.mrb[0].mxu0
      %657 = vmatprep.mubr.bf16.mxu0 0
      %658 = vmatmul.mubr.bf16.gmra.mrb[0].mxu0 %v473
      %v659 = vpop.f32.mrb[0].mxu0
      %v660 = vadd.f32 0.0, %v659
      %v661 = vpop.f32.mrb[0].mxu0
      %v662 = vpop.f32.mrb[0].mxu0
      %v663 = vadd.f32 0.0, %v662
      %v664 = vpop.f32.mrb[0].mxu0
      %665 = vmatprep.mubr.bf16.mxu0 0
      %666 = vmatmul.mubr.bf16.gmra.mrb[0].mxu0 %v476
      %v667 = vpop.f32.mrb[0].mxu0
      %v668 = vadd.f32 0.0, %v667
      %v669 = vpop.f32.mrb[0].mxu0
      %v670 = vpop.f32.mrb[0].mxu0
      %v671 = vadd.f32 0.0, %v670
      %v672 = vpop.f32.mrb[0].mxu0
      %673 = vmatprep.mubr.bf16.mxu0 0
      %674 = vmatmul.mubr.bf16.gmra.mrb[0].mxu0 %v479
      %v675 = vpop.f32.mrb[0].mxu0
      %v676 = vadd.f32 0.0, %v675
      %v677 = vpop.f32.mrb[0].mxu0
      %v678 = vpop.f32.mrb[0].mxu0
      %v679 = vadd.f32 0.0, %v678
      %v680 = vpop.f32.mrb[0].mxu0
      %681 = vmatprep.mubr.bf16.mxu0 0
      %682 = vmatmul.mubr.bf16.gmra.mrb[0].mxu0 %v482
      %v683 = vpop.f32.mrb[0].mxu0
      %v684 = vadd.f32 0.0, %v683
      %v685 = vpop.f32.mrb[0].mxu0
      %v686 = vpop.f32.mrb[0].mxu0
      %v687 = vadd.f32 0.0, %v686
      %v688 = vpop.f32.mrb[0].mxu0
      %689 = vmatprep.mubr.bf16.mxu0 0
      %690 = vmatmul.mubr.bf16.gmra.mrb[0].mxu0 %v485
      %v691 = vpop.f32.mrb[0].mxu0
      %v692 = vadd.f32 0.0, %v691
      %v693 = vpop.f32.mrb[0].mxu0
      %v694 = vpop.f32.mrb[0].mxu0
      %v695 = vadd.f32 0.0, %v694
      %v696 = vpop.f32.mrb[0].mxu0
      %697 = vmatprep.mubr.bf16.mxu0 0
      %698 = vmatmul.mubr.bf16.gmra.mrb[0].mxu0 %v488
      %v699 = vpop.f32.mrb[0].mxu0
      %v700 = vadd.f32 0.0, %v699
      %v701 = vpop.f32.mrb[0].mxu0
      %v702 = vpop.f32.mrb[0].mxu0
      %v703 = vadd.f32 0.0, %v702
      %v704 = vpop.f32.mrb[0].mxu0
      %705 = vmatprep.mubr.bf16.mxu0 0
      %706 = vmatmul.mubr.bf16.gmra.mrb[0].mxu0 %v491
      %v707 = vpop.f32.mrb[0].mxu0
      %v708 = vadd.f32 0.0, %v707
      %v709 = vpop.f32.mrb[0].mxu0
      %v710 = vpop.f32.mrb[0].mxu0
      %v711 = vadd.f32 0.0, %v710
      %v712 = vpop.f32.mrb[0].mxu0
      %713 = vmatprep.mubr.bf16.mxu0 0
      %714 = vmatmul.mubr.bf16.gmra.mrb[0].mxu0 %v494
      %v715 = vpop.f32.mrb[0].mxu0
      %v716 = vadd.f32 0.0, %v715
      %v717 = vpop.f32.mrb[0].mxu0
      %v718 = vpop.f32.mrb[0].mxu0
      %v719 = vadd.f32 0.0, %v718
      %v720 = vpop.f32.mrb[0].mxu0
      %721 = vmatprep.mubr.bf16.mxu0 0
      %722 = vmatmul.mubr.bf16.gmra.mrb[0].mxu0 %v497
      %v723 = vpop.f32.mrb[0].mxu0
      %v724 = vadd.f32 0.0, %v723
      %v725 = vpop.f32.mrb[0].mxu0
      %v726 = vpop.f32.mrb[0].mxu0
      %v727 = vadd.f32 0.0, %v726
      %v728 = vpop.f32.mrb[0].mxu0
      %729 = vmatprep.mubr.bf16.mxu0 0
      %730 = vmatmul.mubr.bf16.gmra.mrb[0].mxu0 %v500
      %v731 = vpop.f32.mrb[0].mxu0
      %v732 = vadd.f32 0.0, %v731
      %v733 = vpop.f32.mrb[0].mxu0
      %v734 = vpop.f32.mrb[0].mxu0
      %v735 = vadd.f32 0.0, %v734
      %v736 = vpop.f32.mrb[0].mxu0
      %737 = vmatprep.mubr.bf16.mxu0 0
      %738 = vmatmul.mubr.bf16.gmra.mrb[0].mxu0 %v503
      %v739 = vpop.f32.mrb[0].mxu0
      %v740 = vadd.f32 0.0, %v739
      %v741 = vpop.f32.mrb[0].mxu0
      %v742 = vpop.f32.mrb[0].mxu0
      %v743 = vadd.f32 0.0, %v742
      %v744 = vpop.f32.mrb[0].mxu0
      %745 = vmatprep.mubr.bf16.mxu0 0
      %746 = vmatmul.mubr.bf16.gmra.mrb[0].mxu0 %v506
      %v747 = vpop.f32.mrb[0].mxu0
      %v748 = vadd.f32 0.0, %v747
      %v749 = vpop.f32.mrb[0].mxu0
      %v750 = vpop.f32.mrb[0].mxu0
      %v751 = vadd.f32 0.0, %v750
      %v752 = vpop.f32.mrb[0].mxu0
      %753 = vmatprep.mubr.bf16.mxu0 0
      %754 = vmatmul.mubr.bf16.gmra.mrb[0].mxu0 %v509
      %v755 = vpop.f32.mrb[0].mxu0
      %v756 = vadd.f32 0.0, %v755
      %v757 = vpop.f32.mrb[0].mxu0
      %v758 = vpop.f32.mrb[0].mxu0
      %v759 = vadd.f32 0.0, %v758
      %v760 = vpop.f32.mrb[0].mxu0
      %761 = vmatprep.mubr.bf16.mxu0 0
      %762 = vmatmul.mubr.bf16.gmra.mrb[0].mxu0 %v512
      %v763 = vpop.f32.mrb[0].mxu0
      %v764 = vadd.f32 0.0, %v763
      %v765 = vpop.f32.mrb[0].mxu0
      %v766 = vpop.f32.mrb[0].mxu0
      %v767 = vadd.f32 0.0, %v766
      %v768 = vpop.f32.mrb[0].mxu0
      %769 = vmatprep.mubr.bf16.mxu0 0
      %770 = vmatmul.mubr.bf16.gmra.mrb[0].mxu0 %v515
      %v771 = vpop.f32.mrb[0].mxu0
      %v772 = vadd.f32 0.0, %v771
      %v773 = vpop.f32.mrb[0].mxu0
      %v774 = vpop.f32.mrb[0].mxu0
      %v775 = vadd.f32 0.0, %v774
      %v776 = vpop.f32.mrb[0].mxu0
      %777 = vmatprep.mubr.bf16.mxu0 0
      %778 = vmatmul.mubr.bf16.gmra.mrb[0].mxu0 %v518
      %v779 = vpop.f32.mrb[0].mxu0
      %v780 = vadd.f32 0.0, %v779
      %v781 = vpop.f32.mrb[0].mxu0
      %v782 = vpop.f32.mrb[0].mxu0
      %v783 = vadd.f32 0.0, %v782
      %v784 = vpop.f32.mrb[0].mxu0
      %785 = vmatprep.mubr.bf16.mxu0 0
      %786 = vmatmul.mubr.bf16.gmra.mrb[0].mxu0 %v521
      %v787 = vpop.f32.mrb[0].mxu0
      %v788 = vadd.f32 0.0, %v787
      %v789 = vpop.f32.mrb[0].mxu0
      %v790 = vpop.f32.mrb[0].mxu0
      %v791 = vadd.f32 0.0, %v790
      %v792 = vpop.f32.mrb[0].mxu0
      %793 = vmatprep.mubr.bf16.mxu0 0
      %794 = vmatmul.mubr.bf16.gmra.mrb[0].mxu0 %v524
      %v795 = vpop.f32.mrb[0].mxu0
      %v796 = vadd.f32 0.0, %v795
      %v797 = vpop.f32.mrb[0].mxu0
      %v798 = vpop.f32.mrb[0].mxu0
      %v799 = vadd.f32 0.0, %v798
      %v800 = vpop.f32.mrb[0].mxu0
      %801 = vmatprep.mubr.bf16.mxu0 0
      %802 = vmatmul.mubr.bf16.gmra.mrb[0].mxu0 %v527
      %v803 = vpop.f32.mrb[0].mxu0
      %v804 = vadd.f32 0.0, %v803
      %v805 = vpop.f32.mrb[0].mxu0
      %v806 = vpop.f32.mrb[0].mxu0
      %v807 = vadd.f32 0.0, %v806
      %v808 = vpop.f32.mrb[0].mxu0
      %809 = vmatprep.mubr.bf16.mxu0 0
      %810 = vmatmul.mubr.bf16.gmra.mrb[0].mxu0 %v530
      %v811 = vpop.f32.mrb[0].mxu0
      %v812 = vadd.f32 0.0, %v811
      %v813 = vpop.f32.mrb[0].mxu0
      %v814 = vpop.f32.mrb[0].mxu0
      %v815 = vadd.f32 0.0, %v814
      %v816 = vpop.f32.mrb[0].mxu0
      %817 = vmatprep.mubr.bf16.mxu0 0
      %818 = vmatmul.mubr.bf16.gmra.mrb[0].mxu0 %v533
      %v819 = vpop.f32.mrb[0].mxu0
      %v820 = vadd.f32 0.0, %v819
      %v821 = vpop.f32.mrb[0].mxu0
      %v822 = vpop.f32.mrb[0].mxu0
      %v823 = vadd.f32 0.0, %v822
      %v824 = vpop.f32.mrb[0].mxu0
      %825 = vmatprep.mubr.bf16.mxu0 0
      %826 = vmatmul.mubr.bf16.gmra.mrb[0].mxu0 %v536
      %v827 = vpop.f32.mrb[0].mxu0
      %v828 = vadd.f32 0.0, %v827
      %v829 = vpop.f32.mrb[0].mxu0
      %v830 = vpop.f32.mrb[0].mxu0
      %v831 = vadd.f32 0.0, %v830
      %v832 = vpop.f32.mrb[0].mxu0
      %833 = vdwg.mxu0
      %v834 = vld [vmem:[%s2] sm:$0x1]
      %v836 = vlaneseq
      %v837 = vshrl.u32 %v836, 7
      %v838 = vsub.s32 0, %v837
      %v839 = vrot.slane %v834, %v838
      %v841 = vmul.f32 %v580, %v839
      %v842 = vmul.f32 %v583, %v839
      %v843 = vmul.f32 %v588, %v839
      %v844 = vmul.f32 %v591, %v839
      %v845 = vmul.f32 %v596, %v839
      %v846 = vmul.f32 %v599, %v839
      %v847 = vmul.f32 %v604, %v839
      %v848 = vmul.f32 %v607, %v839
      %v849 = vmul.f32 %v612, %v839
      %v850 = vmul.f32 %v615, %v839
      %v851 = vmul.f32 %v620, %v839
      %v852 = vmul.f32 %v623, %v839
      %v853 = vmul.f32 %v628, %v839
      %v854 = vmul.f32 %v631, %v839
      %v855 = vmul.f32 %v636, %v839
      %v856 = vmul.f32 %v639, %v839
      %v857 = vmul.f32 %v644, %v839
      %v858 = vmul.f32 %v647, %v839
      %v859 = vmul.f32 %v652, %v839
      %v860 = vmul.f32 %v655, %v839
      %v861 = vmul.f32 %v660, %v839
      %v862 = vmul.f32 %v663, %v839
      %v863 = vmul.f32 %v668, %v839
      %v864 = vmul.f32 %v671, %v839
      %v865 = vmul.f32 %v676, %v839
      %v866 = vmul.f32 %v679, %v839
      %v867 = vmul.f32 %v684, %v839
      %v868 = vmul.f32 %v687, %v839
      %v869 = vmul.f32 %v692, %v839
      %v870 = vmul.f32 %v695, %v839
      %v871 = vmul.f32 %v700, %v839
      %v872 = vmul.f32 %v703, %v839
      %v873 = vmul.f32 %v708, %v839
      %v874 = vmul.f32 %v711, %v839
      %v875 = vmul.f32 %v716, %v839
      %v876 = vmul.f32 %v719, %v839
      %v877 = vmul.f32 %v724, %v839
      %v878 = vmul.f32 %v727, %v839
      %v879 = vmul.f32 %v732, %v839
      %v880 = vmul.f32 %v735, %v839
      %v881 = vmul.f32 %v740, %v839
      %v882 = vmul.f32 %v743, %v839
      %v883 = vmul.f32 %v748, %v839
      %v884 = vmul.f32 %v751, %v839
      %v885 = vmul.f32 %v756, %v839
      %v886 = vmul.f32 %v759, %v839
      %v887 = vmul.f32 %v764, %v839
      %v888 = vmul.f32 %v767, %v839
      %v889 = vmul.f32 %v772, %v839
      %v890 = vmul.f32 %v775, %v839
      %v891 = vmul.f32 %v780, %v839
      %v892 = vmul.f32 %v783, %v839
      %v893 = vmul.f32 %v788, %v839
      %v894 = vmul.f32 %v791, %v839
      %v895 = vmul.f32 %v796, %v839
      %v896 = vmul.f32 %v799, %v839
      %v897 = vmul.f32 %v804, %v839
      %v898 = vmul.f32 %v807, %v839
      %v899 = vmul.f32 %v812, %v839
      %v900 = vmul.f32 %v815, %v839
      %v901 = vmul.f32 %v820, %v839
      %v902 = vmul.f32 %v823, %v839
      %v903 = vmul.f32 %v828, %v839
      %v904 = vmul.f32 %v831, %v839
      %v905 = vld [vmem:[%s3] sm:$0x1]
      %v907 = vlaneseq
      %v908 = vshrl.u32 %v907, 7
      %v909 = vsub.s32 0, %v908
      %v910 = vrot.slane %v905, %v909
      %v912 = vadd.f32 %v841, %v910
      %v913 = vadd.f32 %v842, %v910
      %v914 = vadd.f32 %v843, %v910
      %v915 = vadd.f32 %v844, %v910
      %v916 = vadd.f32 %v845, %v910
      %v917 = vadd.f32 %v846, %v910
      %v918 = vadd.f32 %v847, %v910
      %v919 = vadd.f32 %v848, %v910
      %v920 = vadd.f32 %v849, %v910
      %v921 = vadd.f32 %v850, %v910
      %v922 = vadd.f32 %v851, %v910
      %v923 = vadd.f32 %v852, %v910
      %v924 = vadd.f32 %v853, %v910
      %v925 = vadd.f32 %v854, %v910
      %v926 = vadd.f32 %v855, %v910
      %v927 = vadd.f32 %v856, %v910
      %v928 = vadd.f32 %v857, %v910
      %v929 = vadd.f32 %v858, %v910
      %v930 = vadd.f32 %v859, %v910
      %v931 = vadd.f32 %v860, %v910
      %v932 = vadd.f32 %v861, %v910
      %v933 = vadd.f32 %v862, %v910
      %v934 = vadd.f32 %v863, %v910
      %v935 = vadd.f32 %v864, %v910
      %v936 = vadd.f32 %v865, %v910
      %v937 = vadd.f32 %v866, %v910
      %v938 = vadd.f32 %v867, %v910
      %v939 = vadd.f32 %v868, %v910
      %v940 = vadd.f32 %v869, %v910
      %v941 = vadd.f32 %v870, %v910
      %v942 = vadd.f32 %v871, %v910
      %v943 = vadd.f32 %v872, %v910
      %v944 = vadd.f32 %v873, %v910
      %v945 = vadd.f32 %v874, %v910
      %v946 = vadd.f32 %v875, %v910
      %v947 = vadd.f32 %v876, %v910
      %v948 = vadd.f32 %v877, %v910
      %v949 = vadd.f32 %v878, %v910
      %v950 = vadd.f32 %v879, %v910
      %v951 = vadd.f32 %v880, %v910
      %v952 = vadd.f32 %v881, %v910
      %v953 = vadd.f32 %v882, %v910
      %v954 = vadd.f32 %v883, %v910
      %v955 = vadd.f32 %v884, %v910
      %v956 = vadd.f32 %v885, %v910
      %v957 = vadd.f32 %v886, %v910
      %v958 = vadd.f32 %v887, %v910
      %v959 = vadd.f32 %v888, %v910
      %v960 = vadd.f32 %v889, %v910
      %v961 = vadd.f32 %v890, %v910
      %v962 = vadd.f32 %v891, %v910
      %v963 = vadd.f32 %v892, %v910
      %v964 = vadd.f32 %v893, %v910
      %v965 = vadd.f32 %v894, %v910
      %v966 = vadd.f32 %v895, %v910
      %v967 = vadd.f32 %v896, %v910
      %v968 = vadd.f32 %v897, %v910
      %v969 = vadd.f32 %v898, %v910
      %v970 = vadd.f32 %v899, %v910
      %v971 = vadd.f32 %v900, %v910
      %v972 = vadd.f32 %v901, %v910
      %v973 = vadd.f32 %v902, %v910
      %v974 = vadd.f32 %v903, %v910
      %v975 = vadd.f32 %v904, %v910
      %v976 = vmax.f32 %v912, 0.0
      %v977 = vmax.f32 %v913, 0.0
      %v978 = vmax.f32 %v914, 0.0
      %v979 = vmax.f32 %v915, 0.0
      %v980 = vmax.f32 %v916, 0.0
      %v981 = vmax.f32 %v917, 0.0
      %v982 = vmax.f32 %v918, 0.0
      %v983 = vmax.f32 %v919, 0.0
      %v984 = vmax.f32 %v920, 0.0
      %v985 = vmax.f32 %v921, 0.0
      %v986 = vmax.f32 %v922, 0.0
      %v987 = vmax.f32 %v923, 0.0
      %v988 = vmax.f32 %v924, 0.0
      %v989 = vmax.f32 %v925, 0.0
      %v990 = vmax.f32 %v926, 0.0
      %v991 = vmax.f32 %v927, 0.0
      %v992 = vmax.f32 %v928, 0.0
      %v993 = vmax.f32 %v929, 0.0
      %v994 = vmax.f32 %v930, 0.0
      %v995 = vmax.f32 %v931, 0.0
      %v996 = vmax.f32 %v932, 0.0
      %v997 = vmax.f32 %v933, 0.0
      %v998 = vmax.f32 %v934, 0.0
      %v999 = vmax.f32 %v935, 0.0
      %v1000 = vmax.f32 %v936, 0.0
      %v1001 = vmax.f32 %v937, 0.0
      %v1002 = vmax.f32 %v938, 0.0
      %v1003 = vmax.f32 %v939, 0.0
      %v1004 = vmax.f32 %v940, 0.0
      %v1005 = vmax.f32 %v941, 0.0
      %v1006 = vmax.f32 %v942, 0.0
      %v1007 = vmax.f32 %v943, 0.0
      %v1008 = vmax.f32 %v944, 0.0
      %v1009 = vmax.f32 %v945, 0.0
      %v1010 = vmax.f32 %v946, 0.0
      %v1011 = vmax.f32 %v947, 0.0
      %v1012 = vmax.f32 %v948, 0.0
      %v1013 = vmax.f32 %v949, 0.0
      %v1014 = vmax.f32 %v950, 0.0
      %v1015 = vmax.f32 %v951, 0.0
      %v1016 = vmax.f32 %v952, 0.0
      %v1017 = vmax.f32 %v953, 0.0
      %v1018 = vmax.f32 %v954, 0.0
      %v1019 = vmax.f32 %v955, 0.0
      %v1020 = vmax.f32 %v956, 0.0
      %v1021 = vmax.f32 %v957, 0.0
      %v1022 = vmax.f32 %v958, 0.0
      %v1023 = vmax.f32 %v959, 0.0
      %v1024 = vmax.f32 %v960, 0.0
      %v1025 = vmax.f32 %v961, 0.0
      %v1026 = vmax.f32 %v962, 0.0
      %v1027 = vmax.f32 %v963, 0.0
      %v1028 = vmax.f32 %v964, 0.0
      %v1029 = vmax.f32 %v965, 0.0
      %v1030 = vmax.f32 %v966, 0.0
      %v1031 = vmax.f32 %v967, 0.0
      %v1032 = vmax.f32 %v968, 0.0
      %v1033 = vmax.f32 %v969, 0.0
      %v1034 = vmax.f32 %v970, 0.0
      %v1035 = vmax.f32 %v971, 0.0
      %v1036 = vmax.f32 %v972, 0.0
      %v1037 = vmax.f32 %v973, 0.0
      %v1038 = vmax.f32 %v974, 0.0
      %v1039 = vmax.f32 %v975, 0.0
      %v1040 = vpack.c.bf16 %v977, %v976
      %v1041 = vpack.c.bf16 %v979, %v978
      %v1042 = vpack.c.bf16 %v981, %v980
      %v1043 = vpack.c.bf16 %v983, %v982
      %v1044 = vpack.c.bf16 %v985, %v984
      %v1045 = vpack.c.bf16 %v987, %v986
      %v1046 = vpack.c.bf16 %v989, %v988
      %v1047 = vpack.c.bf16 %v991, %v990
      %v1048 = vpack.c.bf16 %v993, %v992
      %v1049 = vpack.c.bf16 %v995, %v994
      %v1050 = vpack.c.bf16 %v997, %v996
      %v1051 = vpack.c.bf16 %v999, %v998
      %v1052 = vpack.c.bf16 %v1001, %v1000
      %v1053 = vpack.c.bf16 %v1003, %v1002
      %v1054 = vpack.c.bf16 %v1005, %v1004
      %v1055 = vpack.c.bf16 %v1007, %v1006
      %v1056 = vpack.c.bf16 %v1009, %v1008
      %v1057 = vpack.c.bf16 %v1011, %v1010
      %v1058 = vpack.c.bf16 %v1013, %v1012
      %v1059 = vpack.c.bf16 %v1015, %v1014
      %v1060 = vpack.c.bf16 %v1017, %v1016
      %v1061 = vpack.c.bf16 %v1019, %v1018
      %v1062 = vpack.c.bf16 %v1021, %v1020
      %v1063 = vpack.c.bf16 %v1023, %v1022
      %v1064 = vpack.c.bf16 %v1025, %v1024
      %v1065 = vpack.c.bf16 %v1027, %v1026
      %v1066 = vpack.c.bf16 %v1029, %v1028
      %v1067 = vpack.c.bf16 %v1031, %v1030
      %v1068 = vpack.c.bf16 %v1033, %v1032
      %v1069 = vpack.c.bf16 %v1035, %v1034
      %v1070 = vpack.c.bf16 %v1037, %v1036
      %v1071 = vpack.c.bf16 %v1039, %v1038
      %v1104 = vunpack.c.l.b16 %v1040
      %v1105 = vunpack.c.h.b16 %v1040
      %v1106 = vunpack.c.l.b16 %v1041
      %v1107 = vunpack.c.h.b16 %v1041
      %v1108 = vunpack.c.l.b16 %v1042
      %v1109 = vunpack.c.h.b16 %v1042
      %v1110 = vunpack.c.l.b16 %v1043
      %v1111 = vunpack.c.h.b16 %v1043
      %v1112 = vunpack.c.l.b16 %v1044
      %v1113 = vunpack.c.h.b16 %v1044
      %v1114 = vunpack.c.l.b16 %v1045
      %v1115 = vunpack.c.h.b16 %v1045
      %v1116 = vunpack.c.l.b16 %v1046
      %v1117 = vunpack.c.h.b16 %v1046
      %v1118 = vunpack.c.l.b16 %v1047
      %v1119 = vunpack.c.h.b16 %v1047
      %v1120 = vunpack.c.l.b16 %v1048
      %v1121 = vunpack.c.h.b16 %v1048
      %v1122 = vunpack.c.l.b16 %v1049
      %v1123 = vunpack.c.h.b16 %v1049
      %v1124 = vunpack.c.l.b16 %v1050
      %v1125 = vunpack.c.h.b16 %v1050
      %v1126 = vunpack.c.l.b16 %v1051
      %v1127 = vunpack.c.h.b16 %v1051
      %v1128 = vunpack.c.l.b16 %v1052
      %v1129 = vunpack.c.h.b16 %v1052
      %v1130 = vunpack.c.l.b16 %v1053
      %v1131 = vunpack.c.h.b16 %v1053
      %v1132 = vunpack.c.l.b16 %v1054
      %v1133 = vunpack.c.h.b16 %v1054
      %v1134 = vunpack.c.l.b16 %v1055
      %v1135 = vunpack.c.h.b16 %v1055
      %v1136 = vunpack.c.l.b16 %v1056
      %v1137 = vunpack.c.h.b16 %v1056
      %v1138 = vunpack.c.l.b16 %v1057
      %v1139 = vunpack.c.h.b16 %v1057
      %v1140 = vunpack.c.l.b16 %v1058
      %v1141 = vunpack.c.h.b16 %v1058
      %v1142 = vunpack.c.l.b16 %v1059
      %v1143 = vunpack.c.h.b16 %v1059
      %v1144 = vunpack.c.l.b16 %v1060
      %v1145 = vunpack.c.h.b16 %v1060
      %v1146 = vunpack.c.l.b16 %v1061
      %v1147 = vunpack.c.h.b16 %v1061
      %v1148 = vunpack.c.l.b16 %v1062
      %v1149 = vunpack.c.h.b16 %v1062
      %v1150 = vunpack.c.l.b16 %v1063
      %v1151 = vunpack.c.h.b16 %v1063
      %v1152 = vunpack.c.l.b16 %v1064
      %v1153 = vunpack.c.h.b16 %v1064
      %v1154 = vunpack.c.l.b16 %v1065
      %v1155 = vunpack.c.h.b16 %v1065
      %v1156 = vunpack.c.l.b16 %v1066
      %v1157 = vunpack.c.h.b16 %v1066
      %v1158 = vunpack.c.l.b16 %v1067
      %v1159 = vunpack.c.h.b16 %v1067
      %v1160 = vunpack.c.l.b16 %v1068
      %v1161 = vunpack.c.h.b16 %v1068
      %v1162 = vunpack.c.l.b16 %v1069
      %v1163 = vunpack.c.h.b16 %v1069
      %v1164 = vunpack.c.l.b16 %v1070
      %v1165 = vunpack.c.h.b16 %v1070
      %v1166 = vunpack.c.l.b16 %v1071
      %v1167 = vunpack.c.h.b16 %v1071
      %v1168 = vpack.c.b16 %v1104, %v1104
      %v1169 = vpack.c.b16 %v1105, %v1105
      %v1170 = vpack.c.b16 %v1106, %v1106
      %v1171 = vpack.c.b16 %v1107, %v1107
      %v1172 = vpack.c.b16 %v1108, %v1108
      %v1173 = vpack.c.b16 %v1109, %v1109
      %v1174 = vpack.c.b16 %v1110, %v1110
      %v1175 = vpack.c.b16 %v1111, %v1111
      %v1176 = vpack.c.b16 %v1112, %v1112
      %v1177 = vpack.c.b16 %v1113, %v1113
      %v1178 = vpack.c.b16 %v1114, %v1114
      %v1179 = vpack.c.b16 %v1115, %v1115
      %v1180 = vpack.c.b16 %v1116, %v1116
      %v1181 = vpack.c.b16 %v1117, %v1117
      %v1182 = vpack.c.b16 %v1118, %v1118
      %v1183 = vpack.c.b16 %v1119, %v1119
      %v1184 = vpack.c.b16 %v1120, %v1120
      %v1185 = vpack.c.b16 %v1121, %v1121
      %v1186 = vpack.c.b16 %v1122, %v1122
      %v1187 = vpack.c.b16 %v1123, %v1123
      %v1188 = vpack.c.b16 %v1124, %v1124
      %v1189 = vpack.c.b16 %v1125, %v1125
      %v1190 = vpack.c.b16 %v1126, %v1126
      %v1191 = vpack.c.b16 %v1127, %v1127
      %v1192 = vpack.c.b16 %v1128, %v1128
      %v1193 = vpack.c.b16 %v1129, %v1129
      %v1194 = vpack.c.b16 %v1130, %v1130
      %v1195 = vpack.c.b16 %v1131, %v1131
      %v1196 = vpack.c.b16 %v1132, %v1132
      %v1197 = vpack.c.b16 %v1133, %v1133
      %v1198 = vpack.c.b16 %v1134, %v1134
      %v1199 = vpack.c.b16 %v1135, %v1135
      %v1200 = vpack.c.b16 %v1136, %v1136
      %v1201 = vpack.c.b16 %v1137, %v1137
      %v1202 = vpack.c.b16 %v1138, %v1138
      %v1203 = vpack.c.b16 %v1139, %v1139
      %v1204 = vpack.c.b16 %v1140, %v1140
      %v1205 = vpack.c.b16 %v1141, %v1141
      %v1206 = vpack.c.b16 %v1142, %v1142
      %v1207 = vpack.c.b16 %v1143, %v1143
      %v1208 = vpack.c.b16 %v1144, %v1144
      %v1209 = vpack.c.b16 %v1145, %v1145
      %v1210 = vpack.c.b16 %v1146, %v1146
      %v1211 = vpack.c.b16 %v1147, %v1147
      %v1212 = vpack.c.b16 %v1148, %v1148
      %v1213 = vpack.c.b16 %v1149, %v1149
      %v1214 = vpack.c.b16 %v1150, %v1150
      %v1215 = vpack.c.b16 %v1151, %v1151
      %v1216 = vpack.c.b16 %v1152, %v1152
      %v1217 = vpack.c.b16 %v1153, %v1153
      %v1218 = vpack.c.b16 %v1154, %v1154
      %v1219 = vpack.c.b16 %v1155, %v1155
      %v1220 = vpack.c.b16 %v1156, %v1156
      %v1221 = vpack.c.b16 %v1157, %v1157
      %v1222 = vpack.c.b16 %v1158, %v1158
      %v1223 = vpack.c.b16 %v1159, %v1159
      %v1224 = vpack.c.b16 %v1160, %v1160
      %v1225 = vpack.c.b16 %v1161, %v1161
      %v1226 = vpack.c.b16 %v1162, %v1162
      %v1227 = vpack.c.b16 %v1163, %v1163
      %v1228 = vpack.c.b16 %v1164, %v1164
      %v1229 = vpack.c.b16 %v1165, %v1165
      %v1230 = vpack.c.b16 %v1166, %v1166
      %v1231 = vpack.c.b16 %v1167, %v1167
      %vm1296 = vcmask 519168
      %1297 = vst.msk [vmem:[%s199] sm:$0xf] %vm1296, %v1168
      %1298 = vst.msk [vmem:[%s199 + $0x4] sm:$0xf] %vm1296, %v1169
      %1299 = vst.msk [vmem:[%s199 + $0x8] sm:$0xf] %vm1296, %v1170
      %1300 = vst.msk [vmem:[%s199 + $0xc] sm:$0xf] %vm1296, %v1171
      %1301 = vst.msk [vmem:[%s199 + $0x10] sm:$0xf] %vm1296, %v1172
      %1302 = vst.msk [vmem:[%s199 + $0x14] sm:$0xf] %vm1296, %v1173
      %1303 = vst.msk [vmem:[%s199 + $0x18] sm:$0xf] %vm1296, %v1174
      %1304 = vst.msk [vmem:[%s199 + $0x1c] sm:$0xf] %vm1296, %v1175
      %1305 = vst.msk [vmem:[%s199 + $0x20] sm:$0xf] %vm1296, %v1176
      %1306 = vst.msk [vmem:[%s199 + $0x24] sm:$0xf] %vm1296, %v1177
      %1307 = vst.msk [vmem:[%s199 + $0x28] sm:$0xf] %vm1296, %v1178
      %1308 = vst.msk [vmem:[%s199 + $0x2c] sm:$0xf] %vm1296, %v1179
      %1309 = vst.msk [vmem:[%s199 + $0x30] sm:$0xf] %vm1296, %v1180
      %1310 = vst.msk [vmem:[%s199 + $0x34] sm:$0xf] %vm1296, %v1181
      %1311 = vst.msk [vmem:[%s199 + $0x38] sm:$0xf] %vm1296, %v1182
      %1312 = vst.msk [vmem:[%s199 + $0x3c] sm:$0xf] %vm1296, %v1183
      %1313 = vst.msk [vmem:[%s199 + $0x40] sm:$0xf] %vm1296, %v1184
      %1314 = vst.msk [vmem:[%s199 + $0x44] sm:$0xf] %vm1296, %v1185
      %1315 = vst.msk [vmem:[%s199 + $0x48] sm:$0xf] %vm1296, %v1186
      %1316 = vst.msk [vmem:[%s199 + $0x4c] sm:$0xf] %vm1296, %v1187
      %1317 = vst.msk [vmem:[%s199 + $0x50] sm:$0xf] %vm1296, %v1188
      %1318 = vst.msk [vmem:[%s199 + $0x54] sm:$0xf] %vm1296, %v1189
      %1319 = vst.msk [vmem:[%s199 + $0x58] sm:$0xf] %vm1296, %v1190
      %1320 = vst.msk [vmem:[%s199 + $0x5c] sm:$0xf] %vm1296, %v1191
      %1321 = vst.msk [vmem:[%s199 + $0x60] sm:$0xf] %vm1296, %v1192
      %1322 = vst.msk [vmem:[%s199 + $0x64] sm:$0xf] %vm1296, %v1193
      %1323 = vst.msk [vmem:[%s199 + $0x68] sm:$0xf] %vm1296, %v1194
      %1324 = vst.msk [vmem:[%s199 + $0x6c] sm:$0xf] %vm1296, %v1195
      %1325 = vst.msk [vmem:[%s199 + $0x70] sm:$0xf] %vm1296, %v1196
      %1326 = vst.msk [vmem:[%s199 + $0x74] sm:$0xf] %vm1296, %v1197
      %1327 = vst.msk [vmem:[%s199 + $0x78] sm:$0xf] %vm1296, %v1198
      %1328 = vst.msk [vmem:[%s199 + $0x7c] sm:$0xf] %vm1296, %v1199
      %1329 = vst.msk [vmem:[%s199 + $0x80] sm:$0xf] %vm1296, %v1200
      %1330 = vst.msk [vmem:[%s199 + $0x84] sm:$0xf] %vm1296, %v1201
      %1331 = vst.msk [vmem:[%s199 + $0x88] sm:$0xf] %vm1296, %v1202
      %1332 = vst.msk [vmem:[%s199 + $0x8c] sm:$0xf] %vm1296, %v1203
      %1333 = vst.msk [vmem:[%s199 + $0x90] sm:$0xf] %vm1296, %v1204
      %1334 = vst.msk [vmem:[%s199 + $0x94] sm:$0xf] %vm1296, %v1205
      %1335 = vst.msk [vmem:[%s199 + $0x98] sm:$0xf] %vm1296, %v1206
      %1336 = vst.msk [vmem:[%s199 + $0x9c] sm:$0xf] %vm1296, %v1207
      %1337 = vst.msk [vmem:[%s199 + $0xa0] sm:$0xf] %vm1296, %v1208
      %1338 = vst.msk [vmem:[%s199 + $0xa4] sm:$0xf] %vm1296, %v1209
      %1339 = vst.msk [vmem:[%s199 + $0xa8] sm:$0xf] %vm1296, %v1210
      %1340 = vst.msk [vmem:[%s199 + $0xac] sm:$0xf] %vm1296, %v1211
      %1341 = vst.msk [vmem:[%s199 + $0xb0] sm:$0xf] %vm1296, %v1212
      %1342 = vst.msk [vmem:[%s199 + $0xb4] sm:$0xf] %vm1296, %v1213
      %1343 = vst.msk [vmem:[%s199 + $0xb8] sm:$0xf] %vm1296, %v1214
      %1344 = vst.msk [vmem:[%s199 + $0xbc] sm:$0xf] %vm1296, %v1215
      %1345 = vst.msk [vmem:[%s199 + $0xc0] sm:$0xf] %vm1296, %v1216
      %1346 = vst.msk [vmem:[%s199 + $0xc4] sm:$0xf] %vm1296, %v1217
      %1347 = vst.msk [vmem:[%s199 + $0xc8] sm:$0xf] %vm1296, %v1218
      %1348 = vst.msk [vmem:[%s199 + $0xcc] sm:$0xf] %vm1296, %v1219
      %1349 = vst.msk [vmem:[%s199 + $0xd0] sm:$0xf] %vm1296, %v1220
      %1350 = vst.msk [vmem:[%s199 + $0xd4] sm:$0xf] %vm1296, %v1221
      %1351 = vst.msk [vmem:[%s199 + $0xd8] sm:$0xf] %vm1296, %v1222
      %1352 = vst.msk [vmem:[%s199 + $0xdc] sm:$0xf] %vm1296, %v1223
      %1353 = vst.msk [vmem:[%s199 + $0xe0] sm:$0xf] %vm1296, %v1224
      %1354 = vst.msk [vmem:[%s199 + $0xe4] sm:$0xf] %vm1296, %v1225
      %1355 = vst.msk [vmem:[%s199 + $0xe8] sm:$0xf] %vm1296, %v1226
      %1356 = vst.msk [vmem:[%s199 + $0xec] sm:$0xf] %vm1296, %v1227
      %1357 = vst.msk [vmem:[%s199 + $0xf0] sm:$0xf] %vm1296, %v1228
      %1358 = vst.msk [vmem:[%s199 + $0xf4] sm:$0xf] %vm1296, %v1229
      %1359 = vst.msk [vmem:[%s199 + $0xf8] sm:$0xf] %vm1296, %v1230
      %1360 = vst.msk [vmem:[%s199 + $0xfc] sm:$0xf] %vm1296, %v1231
      %s1361 = smul.u32 64, %s15
      %p1362 = scmp.lt.s32.totalorder %s1361, 255
      %s1363 = scalar_select %p1362, %s1361, 255
      %s1364 = smul.addr %s1363, 4
      %s1365 = scalar_lea.vmem %s4, %s1364
      // Predicated region
      $region37: #{tpu_custom_call.1} parent=35 // pred_check
        %p1366 = pneg %p122
      $region38: #{tpu_custom_call.1} parent=35 // pred_check_branch
        %1368 = sbr.rel (%p1366) target = $region40
      $region39: #{tpu_custom_call.1} parent=35 // pred_region
        %s1369 = smul.u32 64, %s15
      $region40: #{tpu_custom_call.1} parent=35 // pred_fallthru
        _
    $region36: #{tpu_custom_call.1} parent=5 // pred_fallthru
      _
    %p1370 = scmp.le.s32.totalorder 2, %s10
    // Predicated region
    $region41: #{tpu_custom_call.1} parent=5 // pred_check
      %p1371 = pneg %p1370
    $region42: #{tpu_custom_call.1} parent=5 // pred_check_branch
      %1373 = sbr.rel (%p1371) target = $region44
    $region43: #{tpu_custom_call.1} parent=5 // pred_region
      %s1374 = ssub.s32 %s10, 2
      // Predicated region
      $region45: #{tpu_custom_call.1} parent=43 // pred_check
        %p1375 = pneg %p128
      $region46: #{tpu_custom_call.1} parent=43 // pred_check_branch
        %1377 = sbr.rel (%p1375) target = $region48
      $region47: #{tpu_custom_call.1} parent=43 // pred_region
        %s1378 = smul.u32 64, %s16
        %p1379 = scmp.lt.s32.totalorder %s1378, 255
        %s1380 = scalar_select %p1379, %s1378, 255
        %s1381 = smul.addr %s1380, 4
        %s1382 = scalar_lea.vmem %s4, %s1381
      $region48: #{tpu_custom_call.1} parent=43 // pred_fallthru
        _
    $region44: #{tpu_custom_call.1} parent=5 // pred_fallthru
      _
  $region6: #{tpu_custom_call.1} parent=0 // loop_footer
    %s14 = sadd.s32 1, %s10
  $region7: #{tpu_custom_call.1} parent=0 // loop_footer_branch
    %9 = sbr.rel target = $region3
  $region8: #{tpu_custom_call.1} parent=0 // loop_exit
    _

</llo_original>
